<compile_context>
chip_gen: v7x
topology: tpu7x:2x2x1
jax: 0.10.0
libtpu: 0.0.40
codegen_flags: <defaults>
</compile_context>

<pallas_src>
import functools

import jax
import jax.numpy as jnp
from jax.experimental import pallas as pl
from jax.experimental.pallas import tpu as pltpu


def _round_up(x: int, m: int) -> int:
    return ((x + m - 1) // m) * m


def _round_down(x: int, m: int) -> int:
    return (x // m) * m


def _cdiv(a: int, b: int) -> int:
    return -(-a // b)


def concat_att_kernel(q_ref, wq_ref, wk_ref, b_ref, k_ref, v_ref, o_ref,
                      qb_sc, m_sc, l_sc, acc_sc,
                      *, n_total: int, block_n: int, mask_n: bool,
                      approx_recip: bool):
    # q_ref: (BB, D)   wq_ref/wk_ref: (1, D)   b_ref: (1, 1) SMEM
    # k_ref/v_ref: (BB, BN, D)   o_ref: (BB, D)
    # scratch: qb_sc/m_sc/l_sc: (BB, 1) f32, acc_sc: (BB, D) f32
    j = pl.program_id(1)

    @pl.when(j == 0)
    def _():
        # Q·wq + bias is constant over N: compute once per batch block.
        q = q_ref[...].astype(jnp.float32)
        wq = wq_ref[...].astype(jnp.float32)
        qb_sc[...] = jnp.sum(q * wq, axis=-1, keepdims=True) + b_ref[0, 0]
        m_sc[...] = jnp.full(m_sc.shape, -jnp.inf, m_sc.dtype)
        l_sc[...] = jnp.zeros(l_sc.shape, l_sc.dtype)
        acc_sc[...] = jnp.zeros(acc_sc.shape, acc_sc.dtype)

    k = k_ref[...].astype(jnp.float32)          # (BB, BN, D)
    v = v_ref[...].astype(jnp.float32)          # (BB, BN, D)
    wk = wk_ref[...].astype(jnp.float32)        # (1, D)

    # alpha[b, n] = K[b, n]·wk + (Q[b]·wq + bias)
    # VPU multiply + two-phase (VPU partial, XLU final) lane reduce over D.
    alpha = jnp.sum(k * wk[None, :, :], axis=-1) + qb_sc[...]   # (BB, BN)

    if mask_n:  # static: only emitted when N was padded up to a multiple of block_n
        n_idx = j * block_n + jax.lax.broadcasted_iota(jnp.int32, alpha.shape, 1)
        alpha = jnp.where(n_idx < n_total, alpha, -jnp.inf)

    # Online (streaming) softmax over the N grid axis.
    m_prev = m_sc[...]
    m_new = jnp.maximum(m_prev, jnp.max(alpha, axis=-1, keepdims=True))  # (BB, 1)
    corr = jnp.exp(m_prev - m_new)                                       # (BB, 1)
    p = jnp.exp(alpha - m_new)                                           # (BB, BN)
    l_sc[...] = corr * l_sc[...] + jnp.sum(p, axis=-1, keepdims=True)
    # Weighted sum of V: VPU broadcast-MAC + sublane reduce (MXU would be
    # weight-load bound here because each batch row is an M=1 contraction).
    acc_sc[...] = corr * acc_sc[...] + jnp.sum(p[:, :, None] * v, axis=1)
    m_sc[...] = m_new

    @pl.when(j == pl.num_programs(1) - 1)
    def _():
        o_ref[...] = (acc_sc[...] *
                      pl.reciprocal(l_sc[...], approx=approx_recip)
                      ).astype(o_ref.dtype)


def concat_att(Q, K, V, weight, bias, *,
               target_block_bytes=4 * 1024 * 1024,       # per K (and V) block, f32 terms
               vmem_limit_bytes=48 * 1024 * 1024,
               approx_recip=False,
               block_b=None, block_n=None):
    """Q: (B, D), K/V: (B, N, D), weight: (1, 2D) or (2D,), bias: (1,) or scalar."""
    B, N, D = K.shape
    assert Q.shape == (B, D) and V.shape == (B, N, D)

    w = jnp.asarray(weight, jnp.float32).reshape(2 * D)
    wq2 = w[:D].reshape(1, D)       # multiplies the Q half of cat(Q, K)
    wk2 = w[D:].reshape(1, D)       # multiplies the K half
    b2 = jnp.asarray(bias, jnp.float32).reshape(1, 1)

    # ---- block sizing -------------------------------------------------------
    # Budget in f32 terms with the lane-padded D (VMEM footprint and all
    # in-kernel temporaries are f32 regardless of the input dtype).
    d_pad = _round_up(D, 128)
    n_pad8 = _round_up(N, 8)
    b_pad8 = _round_up(B, 8)
    rows_target = max(64, target_block_bytes // (d_pad * 4))   # rows of f32[d_pad]

    if block_n is None:
        bn_max = min(n_pad8, max(8, _round_down(rows_target // 8, 8)))
        n_blocks = _cdiv(n_pad8, bn_max)
        block_n = _round_up(_cdiv(n_pad8, n_blocks), 8)   # padding on N < 1 block
    block_n = int(block_n)

    if block_b is None:
        bb_max = max(8, _round_down(rows_target // block_n, 8))
        if b_pad8 >= 16:
            # Guarantee >= 2 steps on the "parallel" batch axis so both v7x
            # TensorCores get work (no effect on single-TC v5e/v6e).
            bb_max = max(8, min(bb_max, _round_down(b_pad8 // 2, 8)))
        bb_max = min(bb_max, b_pad8)
        b_blocks = _cdiv(b_pad8, bb_max)
        block_b = _round_up(_cdiv(b_pad8, b_blocks), 8)
    block_b = int(block_b)

    Bp = _round_up(B, block_b)
    Np = _round_up(N, block_n)
    mask_n = (Np != N)

    if Bp != B or Np != N:
        Q = jnp.pad(Q, ((0, Bp - B), (0, 0)))
        K = jnp.pad(K, ((0, Bp - B), (0, Np - N), (0, 0)))
        V = jnp.pad(V, ((0, Bp - B), (0, Np - N), (0, 0)))

    grid = (Bp // block_b, Np // block_n)   # (batch "parallel", N "arbitrary")

    kernel = functools.partial(
        concat_att_kernel,
        n_total=N, block_n=block_n, mask_n=mask_n, approx_recip=approx_recip)

    out = pl.pallas_call(
        kernel,
        out_shape=jax.ShapeDtypeStruct((Bp, D), V.dtype),
        grid_spec=pltpu.PrefetchScalarGridSpec(
            num_scalar_prefetch=0,
            grid=grid,
            in_specs=[
                pl.BlockSpec((block_b, D), lambda i, j: (i, 0)),              # Q
                pl.BlockSpec((1, D), lambda i, j: (0, 0)),                    # wq
                pl.BlockSpec((1, D), lambda i, j: (0, 0)),                    # wk
                pl.BlockSpec((1, 1), lambda i, j: (0, 0),                     # bias
                             memory_space=pltpu.MemorySpace.SMEM),
                pl.BlockSpec((block_b, block_n, D), lambda i, j: (i, j, 0)),  # K
                pl.BlockSpec((block_b, block_n, D), lambda i, j: (i, j, 0)),  # V
            ],
            out_specs=pl.BlockSpec((block_b, D), lambda i, j: (i, 0)),
            scratch_shapes=[
                pltpu.VMEM((block_b, 1), jnp.float32),   # Q·wq + bias
                pltpu.VMEM((block_b, 1), jnp.float32),   # running max
                pltpu.VMEM((block_b, 1), jnp.float32),   # running denominator
                pltpu.VMEM((block_b, D), jnp.float32),   # context accumulator
            ],
        ),
        compiler_params=pltpu.CompilerParams(
            dimension_semantics=("parallel", "arbitrary"),
            vmem_limit_bytes=vmem_limit_bytes,
        ),
    )(Q, wq2, wk2, b2, K, V)

    return out[:B] if Bp != B else out


def concat_att_reference(Q, K, V, weight, bias):
    """Pure-JAX mirror of the PyTorch forward (concat -> linear -> softmax -> bmm)."""
    B, N, D = K.shape
    Qe = jnp.broadcast_to(Q[:, None, :], (B, N, D))
    X = jnp.concatenate([Qe, K], axis=2)                        # (B, N, 2D)
    alpha = X @ jnp.asarray(weight).reshape(2 * D) + jnp.asarray(bias).reshape(())
    attn = jax.nn.softmax(alpha, axis=-1)                       # (B, N)
    return jnp.einsum("bn,bnd->bd", attn, V)                    # (B, D)


if __name__ == "__main__":
    key = jax.random.PRNGKey(0)
    kq, kk, kv, kw, kb = jax.random.split(key, 5)

    # ---- main small case (matches the module's expected shapes) -------------
    B, N, D = 2, 8, 32          # hidden_size = D
    Q = jax.random.normal(kq, (B, D), dtype=jnp.float32)
    K = jax.random.normal(kk, (B, N, D), dtype=jnp.float32)
    V = jax.random.normal(kv, (B, N, D), dtype=jnp.float32)

    # Deterministic nn.Linear(2*hidden_size, 1) params: weight (1, 2D), bias (1,)
    bound = 1.0 / ((2 * D) ** 0.5)
    weight = jax.random.uniform(kw, (1, 2 * D), jnp.float32, -bound, bound)
    bias = jax.random.uniform(kb, (1,), jnp.float32, -bound, bound)

    out = concat_att(Q, K, V, weight, bias)
    out = jax.block_until_ready(out)
    ref = concat_att_reference(Q, K, V, weight, bias)
    assert out.shape == (B, D)
    assert jnp.allclose(out, ref, atol=1e-4, rtol=1e-4), float(
        jnp.max(jnp.abs(out - ref)))

    # ---- second small case: exercises batch padding, >1 batch block and the
    # ---- N-padding mask of the online softmax --------------------------------
    B2, N2 = 10, 12
    k2q, k2k, k2v = jax.random.split(jax.random.PRNGKey(0), 3)
    Q2 = jax.random.normal(k2q, (B2, D), dtype=jnp.float32)
    K2 = jax.random.normal(k2k, (B2, N2, D), dtype=jnp.float32)
    V2 = jax.random.normal(k2v, (B2, N2, D), dtype=jnp.float32)
    out2 = jax.block_until_ready(
        concat_att(Q2, K2, V2, weight, bias, block_n=8))   # forces 2 N-steps + mask
    ref2 = concat_att_reference(Q2, K2, V2, weight, bias)
    assert out2.shape == (B2, D)
    assert jnp.allclose(out2, ref2, atol=1e-4, rtol=1e-4), float(
        jnp.max(jnp.abs(out2 - ref2)))

    print("KERNEL_OK")
</pallas_src>

<mosaic_0001>
module attributes {stable_mosaic.version = 11 : i64} {
  func.func @concat_att_kernel(%arg0: i32, %arg1: i32, %arg2: memref<8x32xf32, #tpu.memory_space<vmem>>, %arg3: memref<1x32xf32, #tpu.memory_space<vmem>>, %arg4: memref<1x32xf32, #tpu.memory_space<vmem>>, %arg5: memref<1x1xf32, #tpu.memory_space<smem>>, %arg6: memref<8x8x32xf32, #tpu.memory_space<vmem>>, %arg7: memref<8x8x32xf32, #tpu.memory_space<vmem>>, %arg8: memref<8x32xf32, #tpu.memory_space<vmem>>, %arg9: memref<8x1xf32, #tpu.memory_space<vmem>>, %arg10: memref<8x1xf32, #tpu.memory_space<vmem>>, %arg11: memref<8x1xf32, #tpu.memory_space<vmem>>, %arg12: memref<8x32xf32, #tpu.memory_space<vmem>>) attributes {dimension_semantics = [#tpu.dimension_semantics<parallel>, #tpu.dimension_semantics<arbitrary>], iteration_bounds = array<i64: 1, 1>, scalar_prefetch = 0 : i64, scratch_operands = 4 : i64, tpu.core_type = #tpu.core_type<tc>, window_params = [{transform_indices = @transform_0, window_bounds = array<i64: 8, 32>}, {pipeline_mode = #tpu.pipeline_mode<synchronous>, transform_indices = @transform_1, window_bounds = array<i64: 1, 32>}, {pipeline_mode = #tpu.pipeline_mode<synchronous>, transform_indices = @transform_2, window_bounds = array<i64: 1, 32>}, {transform_indices = @transform_3, window_bounds = array<i64: 1, 1>}, {transform_indices = @transform_4, window_bounds = array<i64: 8, 8, 32>}, {transform_indices = @transform_5, window_bounds = array<i64: 8, 8, 32>}, {transform_indices = @transform_6, window_bounds = array<i64: 8, 32>}]} {
    %c0_i32 = arith.constant 0 : i32
    %0 = arith.cmpi eq, %arg1, %c0_i32 : i32
    %1 = arith.extui %0 : i1 to i32
    %c0_i32_0 = arith.constant 0 : i32
    %2 = arith.cmpi ne, %1, %c0_i32_0 : i32
    scf.if %2 {
      %c0_27 = arith.constant 0 : index
      %c0_28 = arith.constant 0 : index
      %41 = vector.load %arg2[%c0_27, %c0_28] : memref<8x32xf32, #tpu.memory_space<vmem>>, vector<8x32xf32>
      %c0_29 = arith.constant 0 : index
      %c0_30 = arith.constant 0 : index
      %42 = vector.load %arg3[%c0_29, %c0_30] : memref<1x32xf32, #tpu.memory_space<vmem>>, vector<1x32xf32>
      %43 = vector.broadcast %42 : vector<1x32xf32> to vector<8x32xf32>
      %44 = arith.mulf %41, %43 : vector<8x32xf32>
      %cst_31 = arith.constant dense<0.000000e+00> : vector<8xf32>
      %45 = vector.multi_reduction <add>, %44, %cst_31 [1] : vector<8x32xf32> to vector<8xf32>
      %46 = vector.shape_cast %45 : vector<8xf32> to vector<8x1xf32>
      %c0_32 = arith.constant 0 : index
      %c0_33 = arith.constant 0 : index
      %47 = memref.load %arg5[%c0_32, %c0_33] : memref<1x1xf32, #tpu.memory_space<smem>>
      %48 = vector.broadcast %47 : f32 to vector<8x1xf32>
      %49 = arith.addf %46, %48 : vector<8x1xf32>
      %c0_34 = arith.constant 0 : index
      %c0_35 = arith.constant 0 : index
      %50 = vector.load %arg9[%c0_34, %c0_35] : memref<8x1xf32, #tpu.memory_space<vmem>>, vector<8x1xf32>
      tpu.vector_store %arg9[%c0_34, %c0_35], %49 {strides = array<i32>} : memref<8x1xf32, #tpu.memory_space<vmem>>, vector<8x1xf32>,
      %cst_36 = arith.constant 0xFF800000 : f32
      %51 = vector.broadcast %cst_36 : f32 to vector<8x1xf32>
      %c0_37 = arith.constant 0 : index
      %c0_38 = arith.constant 0 : index
      %52 = vector.load %arg10[%c0_37, %c0_38] : memref<8x1xf32, #tpu.memory_space<vmem>>, vector<8x1xf32>
      tpu.vector_store %arg10[%c0_37, %c0_38], %51 {strides = array<i32>} : memref<8x1xf32, #tpu.memory_space<vmem>>, vector<8x1xf32>,
      %cst_39 = arith.constant 0.000000e+00 : f32
      %53 = vector.broadcast %cst_39 : f32 to vector<8x1xf32>
      %c0_40 = arith.constant 0 : index
      %c0_41 = arith.constant 0 : index
      %54 = vector.load %arg11[%c0_40, %c0_41] : memref<8x1xf32, #tpu.memory_space<vmem>>, vector<8x1xf32>
      tpu.vector_store %arg11[%c0_40, %c0_41], %53 {strides = array<i32>} : memref<8x1xf32, #tpu.memory_space<vmem>>, vector<8x1xf32>,
      %cst_42 = arith.constant 0.000000e+00 : f32
      %55 = vector.broadcast %cst_42 : f32 to vector<8x32xf32>
      %c0_43 = arith.constant 0 : index
      %c0_44 = arith.constant 0 : index
      %56 = vector.load %arg12[%c0_43, %c0_44] : memref<8x32xf32, #tpu.memory_space<vmem>>, vector<8x32xf32>
      tpu.vector_store %arg12[%c0_43, %c0_44], %55 {strides = array<i32>} : memref<8x32xf32, #tpu.memory_space<vmem>>, vector<8x32xf32>,
    } else {
    }
    %c0 = arith.constant 0 : index
    %c0_1 = arith.constant 0 : index
    %c0_2 = arith.constant 0 : index
    %3 = vector.load %arg6[%c0, %c0_1, %c0_2] : memref<8x8x32xf32, #tpu.memory_space<vmem>>, vector<8x8x32xf32>
    %c0_3 = arith.constant 0 : index
    %c0_4 = arith.constant 0 : index
    %c0_5 = arith.constant 0 : index
    %4 = vector.load %arg7[%c0_3, %c0_4, %c0_5] : memref<8x8x32xf32, #tpu.memory_space<vmem>>, vector<8x8x32xf32>
    %c0_6 = arith.constant 0 : index
    %c0_7 = arith.constant 0 : index
    %5 = vector.load %arg4[%c0_6, %c0_7] : memref<1x32xf32, #tpu.memory_space<vmem>>, vector<1x32xf32>
    %6 = vector.shape_cast %5 : vector<1x32xf32> to vector<1x1x32xf32>
    %7 = vector.broadcast %6 : vector<1x1x32xf32> to vector<8x8x32xf32>
    %8 = arith.mulf %3, %7 : vector<8x8x32xf32>
    %cst = arith.constant dense<0.000000e+00> : vector<8x8xf32>
    %9 = vector.multi_reduction <add>, %8, %cst [2] : vector<8x8x32xf32> to vector<8x8xf32>
    %c0_8 = arith.constant 0 : index
    %c0_9 = arith.constant 0 : index
    %10 = vector.load %arg9[%c0_8, %c0_9] : memref<8x1xf32, #tpu.memory_space<vmem>>, vector<8x1xf32>
    %11 = vector.broadcast %10 : vector<8x1xf32> to vector<8x8xf32>
    %12 = arith.addf %9, %11 : vector<8x8xf32>
    %c0_10 = arith.constant 0 : index
    %c0_11 = arith.constant 0 : index
    %13 = vector.load %arg10[%c0_10, %c0_11] : memref<8x1xf32, #tpu.memory_space<vmem>>, vector<8x1xf32>
    %cst_12 = arith.constant dense<0xFF800000> : vector<8xf32>
    %14 = vector.multi_reduction <maximumf>, %12, %cst_12 [1] : vector<8x8xf32> to vector<8xf32>
    %15 = vector.shape_cast %14 : vector<8xf32> to vector<8x1xf32>
    %16 = arith.maximumf %13, %15 : vector<8x1xf32>
    %17 = arith.subf %13, %16 : vector<8x1xf32>
    %18 = math.exp %17 : vector<8x1xf32>
    %19 = vector.broadcast %16 : vector<8x1xf32> to vector<8x8xf32>
    %20 = arith.subf %12, %19 : vector<8x8xf32>
    %21 = math.exp %20 : vector<8x8xf32>
    %c0_13 = arith.constant 0 : index
    %c0_14 = arith.constant 0 : index
    %22 = vector.load %arg11[%c0_13, %c0_14] : memref<8x1xf32, #tpu.memory_space<vmem>>, vector<8x1xf32>
    %23 = arith.mulf %18, %22 : vector<8x1xf32>
    %cst_15 = arith.constant dense<0.000000e+00> : vector<8xf32>
    %24 = vector.multi_reduction <add>, %21, %cst_15 [1] : vector<8x8xf32> to vector<8xf32>
    %25 = vector.shape_cast %24 : vector<8xf32> to vector<8x1xf32>
    %26 = arith.addf %23, %25 : vector<8x1xf32>
    %c0_16 = arith.constant 0 : index
    %c0_17 = arith.constant 0 : index
    %27 = vector.load %arg11[%c0_16, %c0_17] : memref<8x1xf32, #tpu.memory_space<vmem>>, vector<8x1xf32>
    tpu.vector_store %arg11[%c0_16, %c0_17], %26 {strides = array<i32>} : memref<8x1xf32, #tpu.memory_space<vmem>>, vector<8x1xf32>,
    %c0_18 = arith.constant 0 : index
    %c0_19 = arith.constant 0 : index
    %28 = vector.load %arg12[%c0_18, %c0_19] : memref<8x32xf32, #tpu.memory_space<vmem>>, vector<8x32xf32>
    %29 = vector.broadcast %18 : vector<8x1xf32> to vector<8x32xf32>
    %30 = arith.mulf %29, %28 : vector<8x32xf32>
    %31 = vector.shape_cast %21 : vector<8x8xf32> to vector<8x8x1xf32>
    %32 = vector.broadcast %31 : vector<8x8x1xf32> to vector<8x8x32xf32>
    %33 = arith.mulf %32, %4 : vector<8x8x32xf32>
    %cst_20 = arith.constant dense<0.000000e+00> : vector<8x32xf32>
    %34 = vector.multi_reduction <add>, %33, %cst_20 [1] : vector<8x8x32xf32> to vector<8x32xf32>
    %35 = arith.addf %30, %34 : vector<8x32xf32>
    %c0_21 = arith.constant 0 : index
    %c0_22 = arith.constant 0 : index
    %36 = vector.load %arg12[%c0_21, %c0_22] : memref<8x32xf32, #tpu.memory_space<vmem>>, vector<8x32xf32>
    tpu.vector_store %arg12[%c0_21, %c0_22], %35 {strides = array<i32>} : memref<8x32xf32, #tpu.memory_space<vmem>>, vector<8x32xf32>,
    %c0_23 = arith.constant 0 : index
    %c0_24 = arith.constant 0 : index
    %37 = vector.load %arg10[%c0_23, %c0_24] : memref<8x1xf32, #tpu.memory_space<vmem>>, vector<8x1xf32>
    tpu.vector_store %arg10[%c0_23, %c0_24], %16 {strides = array<i32>} : memref<8x1xf32, #tpu.memory_space<vmem>>, vector<8x1xf32>,
    %c0_i32_25 = arith.constant 0 : i32
    %38 = arith.cmpi eq, %arg1, %c0_i32_25 : i32
    %39 = arith.extui %38 : i1 to i32
    %c0_i32_26 = arith.constant 0 : i32
    %40 = arith.cmpi ne, %39, %c0_i32_26 : i32
    scf.if %40 {
      %c0_27 = arith.constant 0 : index
      %c0_28 = arith.constant 0 : index
      %41 = vector.load %arg12[%c0_27, %c0_28] : memref<8x32xf32, #tpu.memory_space<vmem>>, vector<8x32xf32>
      %c0_29 = arith.constant 0 : index
      %c0_30 = arith.constant 0 : index
      %42 = vector.load %arg11[%c0_29, %c0_30] : memref<8x1xf32, #tpu.memory_space<vmem>>, vector<8x1xf32>
      %43 = tpu.reciprocal %42 : vector<8x1xf32> -> vector<8x1xf32>
      %44 = vector.broadcast %43 : vector<8x1xf32> to vector<8x32xf32>
      %45 = arith.mulf %41, %44 : vector<8x32xf32>
      %c0_31 = arith.constant 0 : index
      %c0_32 = arith.constant 0 : index
      %46 = vector.load %arg8[%c0_31, %c0_32] : memref<8x32xf32, #tpu.memory_space<vmem>>, vector<8x32xf32>
      tpu.vector_store %arg8[%c0_31, %c0_32], %45 {strides = array<i32>} : memref<8x32xf32, #tpu.memory_space<vmem>>, vector<8x32xf32>,
    } else {
    }
    return
  }
  func.func @transform_0(%arg0: i32, %arg1: i32) -> (i32, i32) {
    %c0_i32 = arith.constant 0 : i32
    %c0_i32_0 = arith.constant 0 : i32
    return %arg0, %c0_i32 : i32, i32
  }
  func.func @transform_1(%arg0: i32, %arg1: i32) -> (i32, i32) {
    %c0_i32 = arith.constant 0 : i32
    %c0_i32_0 = arith.constant 0 : i32
    %c0_i32_1 = arith.constant 0 : i32
    return %c0_i32, %c0_i32_0 : i32, i32
  }
  func.func @transform_2(%arg0: i32, %arg1: i32) -> (i32, i32) {
    %c0_i32 = arith.constant 0 : i32
    %c0_i32_0 = arith.constant 0 : i32
    %c0_i32_1 = arith.constant 0 : i32
    return %c0_i32, %c0_i32_0 : i32, i32
  }
  func.func @transform_3(%arg0: i32, %arg1: i32) -> (i32, i32) {
    %c0_i32 = arith.constant 0 : i32
    %c0_i32_0 = arith.constant 0 : i32
    %c0_i32_1 = arith.constant 0 : i32
    return %c0_i32, %c0_i32_0 : i32, i32
  }
  func.func @transform_4(%arg0: i32, %arg1: i32) -> (i32, i32, i32) {
    %c0_i32 = arith.constant 0 : i32
    %c0_i32_0 = arith.constant 0 : i32
    return %arg0, %arg1, %c0_i32 : i32, i32, i32
  }
  func.func @transform_5(%arg0: i32, %arg1: i32) -> (i32, i32, i32) {
    %c0_i32 = arith.constant 0 : i32
    %c0_i32_0 = arith.constant 0 : i32
    return %arg0, %arg1, %c0_i32 : i32, i32, i32
  }
  func.func @transform_6(%arg0: i32, %arg1: i32) -> (i32, i32) {
    %c0_i32 = arith.constant 0 : i32
    %c0_i32_0 = arith.constant 0 : i32
    return %arg0, %c0_i32 : i32, i32
  }
}

</mosaic_0001>

<llo_original>
// kernel: tpu_custom_call.1
$region0: #{tpu_custom_call.1}
  #allocation0 [shape = 'u32[]', space=smem, size = 0x4, offset = 0x4, fixed_abs, tag = 'smem constant byte address 0x4 - core index']
  #allocation1 [shape = 'u32[144,128]{1,0:T(1,128)}', space=vmem, size = 0x12000, scoped, tag = 'internal scratch']
  #allocation2 [shape = 'f32[8,1]{1,0:T(8,128)}', space=vmem, size = 0x1000, scoped, tag = 'scratch operand']
  #allocation3 [shape = 'f32[8,1]{1,0:T(8,128)}', space=vmem, size = 0x1000, scoped, tag = 'scratch operand']
  #allocation4 [shape = 'f32[8,1]{1,0:T(8,128)}', space=vmem, size = 0x1000, scoped, tag = 'scratch operand']
  #allocation5 [shape = 'f32[8,32]{1,0:T(8,128)}', space=vmem, size = 0x1000, scoped, tag = 'scratch operand']
  #allocation6 [shape = 'f32[1,1]{1,0:T(1,128)S(6)}', space=smem, size = 0x200, scoped, tag = 'scoped memory for tpu_custom_call.1']
  %s0 = inlined_call_operand.hbm [shape: f32[8,32], index: 0, kind: input, shape index: {}]
  %s1 = inlined_call_operand.vmem [shape: f32[1,32], index: 1, kind: input, shape index: {}]
  %s2 = inlined_call_operand.vmem [shape: f32[1,32], index: 2, kind: input, shape index: {}]
  %s3 = inlined_call_operand.<no memory space> [shape: f32[1,1], index: 3, kind: input, shape index: {}]
  %s4 = inlined_call_operand.hbm [shape: f32[8,8,32], index: 4, kind: input, shape index: {}]
  %s5 = inlined_call_operand.hbm [shape: f32[8,8,32], index: 5, kind: input, shape index: {}]
  %s6 = inlined_call_operand.hbm [shape: f32[8,32], index: 6, kind: output, shape index: {}]
  %s7 = sld [smem:[#allocation0]]
  $region54: #{tpu_custom_call.1} parent=0
    _
  %s9 = ssub.s32 1, %s7
  %s10 = scalar_select 0, %s9, %s7
  %11 = sst [smem:[#allocation6]] %s3
  $region1: #{tpu_custom_call.1} parent=0
    #allocation7 [shape = 'u8[4096]{0}', space=vmem, size = 0x1000, scoped, tag = 'input window, operand 0, single buffered']
    #allocation8 [shape = 's32[1]{0}', space=sflag, size = 0x4, scoped, tag = 'scoped memory for tpu_custom_call.1']
    #allocation9 [shape = 's32[1]{0}', space=sflag, size = 0x4, scoped, tag = 'scoped memory for tpu_custom_call.1']
    #allocation10 [shape = 'u8[32768]{0}', space=vmem, size = 0x8000, scoped, tag = 'input window, operand 4, single buffered']
    #allocation11 [shape = 's32[1]{0}', space=sflag, size = 0x4, scoped, tag = 'scoped memory for tpu_custom_call.1']
    #allocation12 [shape = 'u8[32768]{0}', space=vmem, size = 0x8000, scoped, tag = 'input window, operand 5, single buffered']
    #allocation13 [shape = 'u8[4096]{0}', space=vmem, size = 0x1000, scoped, tag = 'output window, operand 0, single buffered']
    %12 = vsyncpa [#allocation8], 0
    %13 = vsyncpa [#allocation11], 0
    %14 = vsyncpa [#allocation9], 0
    // Predicated region
    $region2: #{tpu_custom_call.1} parent=1 // pred_check
      _
    $region3: #{tpu_custom_call.1} parent=1 // pred_check_branch
      %16 = sbr.rel (0) target = $region5
    $region4: #{tpu_custom_call.1} parent=1 // pred_region
      %s18 = ssub.s32 128, 128
      %19 = vsyncadd [#allocation8], %s18
      %s21 = sshll.u32 [#allocation7], 4
      %s22 = int_to_ptr.vmem [resolvable:$true] %s21
      %24 = dma.hbm_to_vmem [thread:$0]  %s0, 128, %s22, [#allocation8]
    $region5: #{tpu_custom_call.1} parent=1 // pred_fallthru
      _
    // Predicated region
    $region6: #{tpu_custom_call.1} parent=1 // pred_check
      _
    $region7: #{tpu_custom_call.1} parent=1 // pred_check_branch
      %26 = sbr.rel (0) target = $region9
    $region8: #{tpu_custom_call.1} parent=1 // pred_region
      _
    $region9: #{tpu_custom_call.1} parent=1 // pred_fallthru
      _
    // Predicated region
    $region10: #{tpu_custom_call.1} parent=1 // pred_check
      _
    $region11: #{tpu_custom_call.1} parent=1 // pred_check_branch
      %28 = sbr.rel (0) target = $region13
    $region12: #{tpu_custom_call.1} parent=1 // pred_region
      _
    $region13: #{tpu_custom_call.1} parent=1 // pred_fallthru
      _
    // Predicated region
    $region14: #{tpu_custom_call.1} parent=1 // pred_check
      _
    $region15: #{tpu_custom_call.1} parent=1 // pred_check_branch
      %30 = sbr.rel (0) target = $region17
    $region16: #{tpu_custom_call.1} parent=1 // pred_region
      _
    $region17: #{tpu_custom_call.1} parent=1 // pred_fallthru
      _
    // Predicated region
    $region18: #{tpu_custom_call.1} parent=1 // pred_check
      _
    $region19: #{tpu_custom_call.1} parent=1 // pred_check_branch
      %32 = sbr.rel (0) target = $region21
    $region20: #{tpu_custom_call.1} parent=1 // pred_region
      %s34 = ssub.s32 1024, 1024
      %35 = vsyncadd [#allocation11], %s34
      %s36 = sshll.u32 [#allocation10], 4
      %s37 = int_to_ptr.vmem [resolvable:$true] %s36
      %42 = dma.hbm_to_vmem [thread:$0]  %s4, 1024, %s37, [#allocation11], 128, 128, 8
    $region21: #{tpu_custom_call.1} parent=1 // pred_fallthru
      _
    // Predicated region
    $region22: #{tpu_custom_call.1} parent=1 // pred_check
      _
    $region23: #{tpu_custom_call.1} parent=1 // pred_check_branch
      %44 = sbr.rel (0) target = $region25
    $region24: #{tpu_custom_call.1} parent=1 // pred_region
      %s46 = ssub.s32 1024, 1024
      %47 = vsyncadd [#allocation11], %s46
      %s48 = sshll.u32 [#allocation12], 4
      %s49 = int_to_ptr.vmem [resolvable:$true] %s48
      %54 = dma.hbm_to_vmem [thread:$0]  %s5, 1024, %s49, [#allocation11], 128, 128, 8
    $region25: #{tpu_custom_call.1} parent=1 // pred_fallthru
      _
    // Predicated region
    $region26: #{tpu_custom_call.1} parent=1 // pred_check
      _
    $region27: #{tpu_custom_call.1} parent=1 // pred_check_branch
      %56 = sbr.rel (0) target = $region29
    $region28: #{tpu_custom_call.1} parent=1 // pred_region
      %57 = dma.done [#allocation8], 128
    $region29: #{tpu_custom_call.1} parent=1 // pred_fallthru
      _
    // Predicated region
    $region30: #{tpu_custom_call.1} parent=1 // pred_check
      _
    $region31: #{tpu_custom_call.1} parent=1 // pred_check_branch
      %59 = sbr.rel (0) target = $region33
    $region32: #{tpu_custom_call.1} parent=1 // pred_region
      %60 = dma.done [#allocation11], 1024
    $region33: #{tpu_custom_call.1} parent=1 // pred_fallthru
      _
    // Predicated region
    $region34: #{tpu_custom_call.1} parent=1 // pred_check
      _
    $region35: #{tpu_custom_call.1} parent=1 // pred_check_branch
      %62 = sbr.rel (0) target = $region37
    $region36: #{tpu_custom_call.1} parent=1 // pred_region
      %63 = dma.done [#allocation11], 1024
    $region37: #{tpu_custom_call.1} parent=1 // pred_fallthru
      _
    %p64 = scmp.eq.s32.totalorder 0, 0
    // Predicated region
    $region38: #{tpu_custom_call.1} parent=1 // pred_check
      %p65 = pneg %p64
    $region39: #{tpu_custom_call.1} parent=1 // pred_check_branch
      %67 = sbr.rel (%p65) target = $region41
    $region40: #{tpu_custom_call.1} parent=1 // pred_region
      %v68 = vld [vmem:[#allocation7] sm:$0xff]
      %v69 = vld [vmem:[%s1] sm:$0x1]
      %v71 = vlaneseq
      %v72 = vshrl.u32 %v71, 7
      %v73 = vsub.s32 0, %v72
      %v74 = vrot.slane %v69, %v73
      %v76 = vmul.f32 %v68, %v74
      %vm77 = vcmask 261120
      %v78 = vsel %vm77, %v76, 0.0
      %79 = vadd.xlane.f32.xlu0 %v78
      %v80 = vpop.xlane.xlu0 %79
      %s81 = sld [smem:[#allocation6]]
      %v82 = vstv %s81
      %v83 = vadd.f32 %v80, %v82
      %vm84 = vcmask 7168
      %85 = vst.msk [vmem:[#allocation2] sm:$0xff] %vm84, %v83
      %86 = vst.msk [vmem:[#allocation3] sm:$0xff] %vm84, -inf
      %87 = vst.msk [vmem:[#allocation4] sm:$0xff] %vm84, 0.0
      %88 = vst.msk [vmem:[#allocation5] sm:$0xff] %vm77, 0.0
    $region41: #{tpu_custom_call.1} parent=1 // pred_fallthru
      _
    %v89 = vld [vmem:[#allocation10] sm:$0xff]
    %v90 = vld [vmem:[#allocation10 + $0x8] sm:$0xff]
    %v91 = vld [vmem:[#allocation10 + $0x10] sm:$0xff]
    %v92 = vld [vmem:[#allocation10 + $0x18] sm:$0xff]
    %v93 = vld [vmem:[#allocation10 + $0x20] sm:$0xff]
    %v94 = vld [vmem:[#allocation10 + $0x28] sm:$0xff]
    %v95 = vld [vmem:[#allocation10 + $0x30] sm:$0xff]
    %v96 = vld [vmem:[#allocation10 + $0x38] sm:$0xff]
    %v97 = vld [vmem:[#allocation12] sm:$0xff]
    %v98 = vld [vmem:[#allocation12 + $0x8] sm:$0xff]
    %v99 = vld [vmem:[#allocation12 + $0x10] sm:$0xff]
    %v100 = vld [vmem:[#allocation12 + $0x18] sm:$0xff]
    %v101 = vld [vmem:[#allocation12 + $0x20] sm:$0xff]
    %v102 = vld [vmem:[#allocation12 + $0x28] sm:$0xff]
    %v103 = vld [vmem:[#allocation12 + $0x30] sm:$0xff]
    %v104 = vld [vmem:[#allocation12 + $0x38] sm:$0xff]
    %v105 = vld [vmem:[%s2] sm:$0x1]
    %v107 = vlaneseq
    %v108 = vshrl.u32 %v107, 7
    %v109 = vsub.s32 0, %v108
    %v110 = vrot.slane %v105, %v109
    %v112 = vmul.f32 %v89, %v110
    %v113 = vmul.f32 %v90, %v110
    %v114 = vmul.f32 %v91, %v110
    %v115 = vmul.f32 %v92, %v110
    %v116 = vmul.f32 %v93, %v110
    %v117 = vmul.f32 %v94, %v110
    %v118 = vmul.f32 %v95, %v110
    %v119 = vmul.f32 %v96, %v110
    %vm120 = vcmask 261120
    %v121 = vsel %vm120, %v112, 0.0
    %122 = vadd.xlane.f32.xlu0 %v121
    %v123 = vpop.xlane.xlu0 %122
    %v124 = vsel %vm120, %v113, 0.0
    %125 = vadd.xlane.f32.xlu0 %v124
    %v126 = vpop.xlane.xlu0 %125
    %v127 = vsel %vm120, %v114, 0.0
    %128 = vadd.xlane.f32.xlu0 %v127
    %v129 = vpop.xlane.xlu0 %128
    %v130 = vsel %vm120, %v115, 0.0
    %131 = vadd.xlane.f32.xlu0 %v130
    %v132 = vpop.xlane.xlu0 %131
    %v133 = vsel %vm120, %v116, 0.0
    %134 = vadd.xlane.f32.xlu0 %v133
    %v135 = vpop.xlane.xlu0 %134
    %v136 = vsel %vm120, %v117, 0.0
    %137 = vadd.xlane.f32.xlu0 %v136
    %v138 = vpop.xlane.xlu0 %137
    %v139 = vsel %vm120, %v118, 0.0
    %140 = vadd.xlane.f32.xlu0 %v139
    %v141 = vpop.xlane.xlu0 %140
    %v142 = vsel %vm120, %v119, 0.0
    %143 = vadd.xlane.f32.xlu0 %v142
    %v144 = vpop.xlane.xlu0 %143
    %v145 = vld [vmem:[#allocation2] sm:$0xff]
    %147 = vset.pattern.permute.xlu0 0
    %148 = vperm.xlu0 %147, %v145
    %v149 = vpop.permute.xlu0 %148
    %v150 = vlaneseq
    %v151 = vshrl.u32 %v150, 7
    %v152 = vsub.s32 0, %v151
    %v153 = vrot.slane %v149, %v152
    %v154 = vlaneseq
    %v155 = vshrl.u32 %v154, 7
    %v156 = vsub.s32 1, %v155
    %v157 = vrot.slane %v149, %v156
    %v158 = vlaneseq
    %v159 = vshrl.u32 %v158, 7
    %v160 = vsub.s32 2, %v159
    %v161 = vrot.slane %v149, %v160
    %v162 = vlaneseq
    %v163 = vshrl.u32 %v162, 7
    %v164 = vsub.s32 3, %v163
    %v165 = vrot.slane %v149, %v164
    %v166 = vlaneseq
    %v167 = vshrl.u32 %v166, 7
    %v168 = vsub.s32 4, %v167
    %v169 = vrot.slane %v149, %v168
    %v170 = vlaneseq
    %v171 = vshrl.u32 %v170, 7
    %v172 = vsub.s32 5, %v171
    %v173 = vrot.slane %v149, %v172
    %v174 = vlaneseq
    %v175 = vshrl.u32 %v174, 7
    %v176 = vsub.s32 6, %v175
    %v177 = vrot.slane %v149, %v176
    %v178 = vlaneseq
    %v179 = vshrl.u32 %v178, 7
    %v180 = vsub.s32 7, %v179
    %v181 = vrot.slane %v149, %v180
    %v190 = vadd.f32 %v123, %v153
    %v191 = vadd.f32 %v126, %v157
    %v192 = vadd.f32 %v129, %v161
    %v193 = vadd.f32 %v132, %v165
    %v194 = vadd.f32 %v135, %v169
    %v195 = vadd.f32 %v138, %v173
    %v196 = vadd.f32 %v141, %v177
    %v197 = vadd.f32 %v144, %v181
    %v198 = vld [vmem:[#allocation3] sm:$0xff]
    %207 = vset.pattern.permute.xlu0 0
    %208 = vperm.xlu0 %207, %v190
    %v209 = vpop.permute.xlu0 %208
    %210 = vset.pattern.permute.xlu0 0
    %211 = vperm.xlu0 %210, %v191
    %v212 = vpop.permute.xlu0 %211
    %213 = vset.pattern.permute.xlu0 0
    %214 = vperm.xlu0 %213, %v192
    %v215 = vpop.permute.xlu0 %214
    %216 = vset.pattern.permute.xlu0 0
    %217 = vperm.xlu0 %216, %v193
    %v218 = vpop.permute.xlu0 %217
    %219 = vset.pattern.permute.xlu0 0
    %220 = vperm.xlu0 %219, %v194
    %v221 = vpop.permute.xlu0 %220
    %222 = vset.pattern.permute.xlu0 0
    %223 = vperm.xlu0 %222, %v195
    %v224 = vpop.permute.xlu0 %223
    %225 = vset.pattern.permute.xlu0 0
    %226 = vperm.xlu0 %225, %v196
    %v227 = vpop.permute.xlu0 %226
    %228 = vset.pattern.permute.xlu0 0
    %229 = vperm.xlu0 %228, %v197
    %v230 = vpop.permute.xlu0 %229
    %v231 = vlaneseq
    %v232 = vand.u32 %v231, 127
    %v233 = vlaneseq
    %v234 = vshrl.u32 %v233, 7
    %v235 = vsub.s32 %v232, %v234
    %v236 = vrot.slane %v209, %v235
    %v237 = vlaneseq
    %v238 = vshrl.u32 %v237, 7
    %v239 = vsub.s32 %v232, %v238
    %v240 = vrot.slane %v212, %v239
    %v241 = vlaneseq
    %v242 = vshrl.u32 %v241, 7
    %v243 = vsub.s32 %v232, %v242
    %v244 = vrot.slane %v215, %v243
    %v245 = vlaneseq
    %v246 = vshrl.u32 %v245, 7
    %v247 = vsub.s32 %v232, %v246
    %v248 = vrot.slane %v218, %v247
    %v249 = vlaneseq
    %v250 = vshrl.u32 %v249, 7
    %v251 = vsub.s32 %v232, %v250
    %v252 = vrot.slane %v221, %v251
    %v253 = vlaneseq
    %v254 = vshrl.u32 %v253, 7
    %v255 = vsub.s32 %v232, %v254
    %v256 = vrot.slane %v224, %v255
    %v257 = vlaneseq
    %v258 = vshrl.u32 %v257, 7
    %v259 = vsub.s32 %v232, %v258
    %v260 = vrot.slane %v227, %v259
    %v261 = vlaneseq
    %v262 = vshrl.u32 %v261, 7
    %v263 = vsub.s32 %v232, %v262
    %v264 = vrot.slane %v230, %v263
    %vm265 = vcmask 1041409
    %v266 = vsel %vm265, %v240, %v236
    %vm267 = vcmask 1042434
    %v268 = vsel %vm267, %v244, %v266
    %vm269 = vcmask 1043459
    %v270 = vsel %vm269, %v248, %v268
    %vm271 = vcmask 1044484
    %v272 = vsel %vm271, %v252, %v270
    %vm273 = vcmask 1045509
    %v274 = vsel %vm273, %v256, %v272
    %vm275 = vcmask 1046534
    %v276 = vsel %vm275, %v260, %v274
    %vm277 = vcmask 1047559
    %v278 = vsel %vm277, %v264, %v276
    %vm280 = vcmask 64512
    %v281 = vsel %vm280, %v278, -inf
    %282 = vmax.xlane.f32.xlu0 %v281
    %v283 = vpop.xlane.xlu0 %282
    %v284 = vmax.f32 %v198, %v283
    %v285 = vsub.f32 %v198, %v284
    %v286 = vmul.f32 %v285, 1.442695
    %v287 = vpow.pop %v286
    %289 = vset.pattern.permute.xlu0 0
    %290 = vperm.xlu0 %289, %v284
    %v291 = vpop.permute.xlu0 %290
    %v292 = vlaneseq
    %v293 = vshrl.u32 %v292, 7
    %v294 = vsub.s32 0, %v293
    %v295 = vrot.slane %v291, %v294
    %v296 = vlaneseq
    %v297 = vshrl.u32 %v296, 7
    %v298 = vsub.s32 1, %v297
    %v299 = vrot.slane %v291, %v298
    %v300 = vlaneseq
    %v301 = vshrl.u32 %v300, 7
    %v302 = vsub.s32 2, %v301
    %v303 = vrot.slane %v291, %v302
    %v304 = vlaneseq
    %v305 = vshrl.u32 %v304, 7
    %v306 = vsub.s32 3, %v305
    %v307 = vrot.slane %v291, %v306
    %v308 = vlaneseq
    %v309 = vshrl.u32 %v308, 7
    %v310 = vsub.s32 4, %v309
    %v311 = vrot.slane %v291, %v310
    %v312 = vlaneseq
    %v313 = vshrl.u32 %v312, 7
    %v314 = vsub.s32 5, %v313
    %v315 = vrot.slane %v291, %v314
    %v316 = vlaneseq
    %v317 = vshrl.u32 %v316, 7
    %v318 = vsub.s32 6, %v317
    %v319 = vrot.slane %v291, %v318
    %v320 = vlaneseq
    %v321 = vshrl.u32 %v320, 7
    %v322 = vsub.s32 7, %v321
    %v323 = vrot.slane %v291, %v322
    %v332 = vsub.f32 %v190, %v295
    %v333 = vsub.f32 %v191, %v299
    %v334 = vsub.f32 %v192, %v303
    %v335 = vsub.f32 %v193, %v307
    %v336 = vsub.f32 %v194, %v311
    %v337 = vsub.f32 %v195, %v315
    %v338 = vsub.f32 %v196, %v319
    %v339 = vsub.f32 %v197, %v323
    %v340 = vmul.f32 %v332, 1.442695
    %v341 = vpow.pop %v340
    %v342 = vmul.f32 %v333, 1.442695
    %v343 = vpow.pop %v342
    %v344 = vmul.f32 %v334, 1.442695
    %v345 = vpow.pop %v344
    %v346 = vmul.f32 %v335, 1.442695
    %v347 = vpow.pop %v346
    %v348 = vmul.f32 %v336, 1.442695
    %v349 = vpow.pop %v348
    %v350 = vmul.f32 %v337, 1.442695
    %v351 = vpow.pop %v350
    %v352 = vmul.f32 %v338, 1.442695
    %v353 = vpow.pop %v352
    %v354 = vmul.f32 %v339, 1.442695
    %v355 = vpow.pop %v354
    %v356 = vld [vmem:[#allocation4] sm:$0xff]
    %v357 = vmul.f32 %v287, %v356
    %366 = vset.pattern.permute.xlu0 0
    %367 = vperm.xlu0 %366, %v341
    %v368 = vpop.permute.xlu0 %367
    %369 = vset.pattern.permute.xlu0 0
    %370 = vperm.xlu0 %369, %v343
    %v371 = vpop.permute.xlu0 %370
    %372 = vset.pattern.permute.xlu0 0
    %373 = vperm.xlu0 %372, %v345
    %v374 = vpop.permute.xlu0 %373
    %375 = vset.pattern.permute.xlu0 0
    %376 = vperm.xlu0 %375, %v347
    %v377 = vpop.permute.xlu0 %376
    %378 = vset.pattern.permute.xlu0 0
    %379 = vperm.xlu0 %378, %v349
    %v380 = vpop.permute.xlu0 %379
    %381 = vset.pattern.permute.xlu0 0
    %382 = vperm.xlu0 %381, %v351
    %v383 = vpop.permute.xlu0 %382
    %384 = vset.pattern.permute.xlu0 0
    %385 = vperm.xlu0 %384, %v353
    %v386 = vpop.permute.xlu0 %385
    %387 = vset.pattern.permute.xlu0 0
    %388 = vperm.xlu0 %387, %v355
    %v389 = vpop.permute.xlu0 %388
    %v390 = vlaneseq
    %v391 = vshrl.u32 %v390, 7
    %v392 = vsub.s32 %v232, %v391
    %v393 = vrot.slane %v368, %v392
    %v394 = vlaneseq
    %v395 = vshrl.u32 %v394, 7
    %v396 = vsub.s32 %v232, %v395
    %v397 = vrot.slane %v371, %v396
    %v398 = vlaneseq
    %v399 = vshrl.u32 %v398, 7
    %v400 = vsub.s32 %v232, %v399
    %v401 = vrot.slane %v374, %v400
    %v402 = vlaneseq
    %v403 = vshrl.u32 %v402, 7
    %v404 = vsub.s32 %v232, %v403
    %v405 = vrot.slane %v377, %v404
    %v406 = vlaneseq
    %v407 = vshrl.u32 %v406, 7
    %v408 = vsub.s32 %v232, %v407
    %v409 = vrot.slane %v380, %v408
    %v410 = vlaneseq
    %v411 = vshrl.u32 %v410, 7
    %v412 = vsub.s32 %v232, %v411
    %v413 = vrot.slane %v383, %v412
    %v414 = vlaneseq
    %v415 = vshrl.u32 %v414, 7
    %v416 = vsub.s32 %v232, %v415
    %v417 = vrot.slane %v386, %v416
    %v418 = vlaneseq
    %v419 = vshrl.u32 %v418, 7
    %v420 = vsub.s32 %v232, %v419
    %v421 = vrot.slane %v389, %v420
    %v422 = vsel %vm265, %v397, %v393
    %v423 = vsel %vm267, %v401, %v422
    %v424 = vsel %vm269, %v405, %v423
    %v425 = vsel %vm271, %v409, %v424
    %v426 = vsel %vm273, %v413, %v425
    %v427 = vsel %vm275, %v417, %v426
    %v428 = vsel %vm277, %v421, %v427
    %v430 = vsel %vm280, %v428, 0.0
    %431 = vadd.xlane.f32.xlu0 %v430
    %v432 = vpop.xlane.xlu0 %431
    %v433 = vadd.f32 %v357, %v432
    %vm434 = vcmask 7168
    %435 = vst.msk [vmem:[#allocation4] sm:$0xff] %vm434, %v433
    %v436 = vld [vmem:[#allocation5] sm:$0xff]
    %438 = vset.pattern.permute.xlu0 0
    %439 = vperm.xlu0 %438, %v287
    %v440 = vpop.permute.xlu0 %439
    %v442 = vmul.f32 %v440, %v436
    %v451 = vmul.f32 %v368, %v97
    %v452 = vmul.f32 %v371, %v98
    %v453 = vmul.f32 %v374, %v99
    %v454 = vmul.f32 %v377, %v100
    %v455 = vmul.f32 %v380, %v101
    %v456 = vmul.f32 %v383, %v102
    %v457 = vmul.f32 %v386, %v103
    %v458 = vmul.f32 %v389, %v104
    %v459 = vsel %vm120, %v451, 0.0
    %v460 = vrot.slane %v459, 4
    %v461 = vadd.f32 %v459, %v460
    %v462 = vrot.slane %v461, 2
    %v463 = vadd.f32 %v461, %v462
    %v464 = vrot.slane %v463, 1
    %v465 = vadd.f32 %v463, %v464
    %v466 = vsel %vm120, %v452, 0.0
    %v467 = vrot.slane %v466, 4
    %v468 = vadd.f32 %v466, %v467
    %v469 = vrot.slane %v468, 2
    %v470 = vadd.f32 %v468, %v469
    %v471 = vrot.slane %v470, 1
    %v472 = vadd.f32 %v470, %v471
    %v473 = vsel %vm120, %v453, 0.0
    %v474 = vrot.slane %v473, 4
    %v475 = vadd.f32 %v473, %v474
    %v476 = vrot.slane %v475, 2
    %v477 = vadd.f32 %v475, %v476
    %v478 = vrot.slane %v477, 1
    %v479 = vadd.f32 %v477, %v478
    %v480 = vsel %vm120, %v454, 0.0
    %v481 = vrot.slane %v480, 4
    %v482 = vadd.f32 %v480, %v481
    %v483 = vrot.slane %v482, 2
    %v484 = vadd.f32 %v482, %v483
    %v485 = vrot.slane %v484, 1
    %v486 = vadd.f32 %v484, %v485
    %v487 = vsel %vm120, %v455, 0.0
    %v488 = vrot.slane %v487, 4
    %v489 = vadd.f32 %v487, %v488
    %v490 = vrot.slane %v489, 2
    %v491 = vadd.f32 %v489, %v490
    %v492 = vrot.slane %v491, 1
    %v493 = vadd.f32 %v491, %v492
    %v494 = vsel %vm120, %v456, 0.0
    %v495 = vrot.slane %v494, 4
    %v496 = vadd.f32 %v494, %v495
    %v497 = vrot.slane %v496, 2
    %v498 = vadd.f32 %v496, %v497
    %v499 = vrot.slane %v498, 1
    %v500 = vadd.f32 %v498, %v499
    %v501 = vsel %vm120, %v457, 0.0
    %v502 = vrot.slane %v501, 4
    %v503 = vadd.f32 %v501, %v502
    %v504 = vrot.slane %v503, 2
    %v505 = vadd.f32 %v503, %v504
    %v506 = vrot.slane %v505, 1
    %v507 = vadd.f32 %v505, %v506
    %v508 = vsel %vm120, %v458, 0.0
    %v509 = vrot.slane %v508, 4
    %v510 = vadd.f32 %v508, %v509
    %v511 = vrot.slane %v510, 2
    %v512 = vadd.f32 %v510, %v511
    %v513 = vrot.slane %v512, 1
    %v514 = vadd.f32 %v512, %v513
    %v523 = vsel %vm265, %v472, %v465
    %v524 = vsel %vm267, %v479, %v523
    %v525 = vsel %vm269, %v486, %v524
    %v526 = vsel %vm271, %v493, %v525
    %v527 = vsel %vm273, %v500, %v526
    %v528 = vsel %vm275, %v507, %v527
    %v529 = vsel %vm277, %v514, %v528
    %v531 = vadd.f32 %v442, %v529
    %532 = vst.msk [vmem:[#allocation5] sm:$0xff] %vm120, %v531
    %533 = vst.msk [vmem:[#allocation3] sm:$0xff] %vm434, %v284
    // Predicated region
    $region42: #{tpu_custom_call.1} parent=1 // pred_check
      %p534 = pneg %p64
    $region43: #{tpu_custom_call.1} parent=1 // pred_check_branch
      %536 = sbr.rel (%p534) target = $region45
    $region44: #{tpu_custom_call.1} parent=1 // pred_region
      %v537 = vld [vmem:[#allocation5] sm:$0xff]
      %v538 = vld [vmem:[#allocation4] sm:$0xff]
      %v539 = vrcp.pop %v538
      %541 = vset.pattern.permute.xlu0 0
      %542 = vperm.xlu0 %541, %v539
      %v543 = vpop.permute.xlu0 %542
      %v545 = vmul.f32 %v537, %v543
      %546 = vst.msk [vmem:[#allocation13] sm:$0xff] %vm120, %v545
    $region45: #{tpu_custom_call.1} parent=1 // pred_fallthru
      _
    // Predicated region
    $region46: #{tpu_custom_call.1} parent=1 // pred_check
      _
    $region47: #{tpu_custom_call.1} parent=1 // pred_check_branch
      %548 = sbr.rel (0) target = $region49
    $region48: #{tpu_custom_call.1} parent=1 // pred_region
      %s550 = ssub.s32 128, 128
      %551 = vsyncadd [#allocation9], %s550
      %s553 = sshll.u32 [#allocation13], 4
      %s554 = int_to_ptr.vmem [resolvable:$true] %s553
      %556 = dma.vmem_to_hbm [thread:$0]  %s554, 128, %s6, [#allocation9]
    $region49: #{tpu_custom_call.1} parent=1 // pred_fallthru
      _
    // Predicated region
    $region50: #{tpu_custom_call.1} parent=1 // pred_check
      _
    $region51: #{tpu_custom_call.1} parent=1 // pred_check_branch
      %558 = sbr.rel (0) target = $region53
    $region52: #{tpu_custom_call.1} parent=1 // pred_region
      %559 = dma.done [#allocation9], 128
    $region53: #{tpu_custom_call.1} parent=1 // pred_fallthru
      _
    %560 = vsyncpa [#allocation8], 1
    %561 = vsyncpa [#allocation11], 1
    %562 = vsyncpa [#allocation9], 1

</llo_original>
